<compile_context>
chip_gen: v7x
topology: tpu7x:2x2x1
jax: 0.10.0
libtpu: 0.0.40
codegen_flags: <defaults>
</compile_context>

<pallas_src>
import jax
import jax.numpy as jnp
from jax.experimental import pallas as pl
from jax.experimental.pallas import tpu as pltpu

_MIB = 1024 * 1024


def _round_up(v, m):
    return (v + m - 1) // m * m


def _cdiv(a, b):
    return (a + b - 1) // b


def _vmem_capacity_bytes():
    """Physical VMEM per TensorCore; conservative (v7x-sized) default."""
    try:
        info = pltpu.get_tpu_info()
        for name in ("vmem_capacity_bytes", "vmem_bytes", "vmem_size_bytes"):
            cap = getattr(info, name, None)
            if cap:
                return int(cap)
    except Exception:
        pass
    return 64 * _MIB


def _vmem_bytes(tile_b, tile_h, tile_n, n_in_p, n_hid_e, x_isz, w_isz):
    """Rough VMEM footprint: double-buffered blocks + fp32 scratch + h temps."""
    nk = max(1, n_hid_e // tile_h)
    x_buf = 2 * tile_b * n_in_p * x_isz
    w1_buf = 2 * n_in_p * tile_h * w_isz
    b1_buf = 2 * max(8, nk) * tile_h * w_isz          # resident bias table
    w2_buf = 2 * tile_h * tile_n * w_isz
    b2_buf = 2 * 8 * tile_n * w_isz
    out_buf = 2 * tile_b * tile_n * x_isz
    acc = tile_b * tile_n * 4
    h_f32 = tile_b * tile_h * 4                       # hidden slab in fp32
    h_cast = tile_b * tile_h * w_isz                  # h.astype(w2.dtype) copy
    return (x_buf + w1_buf + b1_buf + w2_buf + b2_buf + out_buf
            + acc + h_f32 + h_cast)


def _choose_feature_tiles(n_in_p, n_hid_p, n_out_p, w_isz, budget):
    """Pick (tile_h, tile_n): prefer combos that keep a >=256 batch tile, then
    the largest feature tiles (fewer reduction steps / larger MXU N)."""
    th_cands = [n_hid_p] if n_hid_p <= 512 else [512, 256, 128]
    tn_cands = [n_out_p] if n_out_p <= 512 else [512, 256, 128]
    tb_cands = (256, 128, 64, 32, 16, 8)
    best = None
    for th in th_cands:
        n_hid_e = _round_up(n_hid_p, th)
        for tn in tn_cands:
            tb = next((c for c in tb_cands
                       if _vmem_bytes(c, th, tn, n_in_p, n_hid_e, 4, w_isz)
                       <= budget), None)
            if tb is None:
                continue
            score = (tb, th + tn, th)
            if best is None or score > best[0]:
                best = (score, th, tn)
    if best is None:
        # Weight slabs alone exceed the budget (very wide n_in).
        # TODO(synk): add an n_in reduction grid axis for extremely wide inputs.
        return 128, 128
    return best[1], best[2]


def _mlp_kernel(x_ref, w1_ref, b1_ref, w2_ref, b2_ref, o_ref, acc_ref):
    k = pl.program_id(2)

    @pl.when(k == 0)
    def _():
        # Initialize the accumulator with the output bias: the epilogue then
        # becomes a pure cast + lane-dense store.
        acc_ref[...] = jnp.broadcast_to(
            b2_ref[...].astype(jnp.float32), acc_ref.shape)

    # Hidden slab: ReLU(x @ W1[:, k-th slab] + b1[k-th slab]) in fp32.
    h = jnp.dot(x_ref[...], w1_ref[...], preferred_element_type=jnp.float32)
    h = jnp.maximum(h + b1_ref[pl.ds(k, 1), :].astype(jnp.float32), 0.0)
    # dropout (eval mode) == identity

    # Cast h to the weight dtype so bf16 weights get the bf16 MXU rate
    # (fp32 weights keep the math exact).
    acc_ref[...] += jnp.dot(h.astype(w2_ref.dtype), w2_ref[...],
                            preferred_element_type=jnp.float32)

    @pl.when(k == pl.num_programs(2) - 1)
    def _():
        o_ref[...] = acc_ref[...].astype(o_ref.dtype)


def make_mlp(w1, b1, w2, b2):
    """Pads/lays out the parameters ONCE and returns `forward(x)`.

    w1: [n_in, n_hidden], b1: [n_hidden] or [1, n_hidden],
    w2: [n_hidden, n_out], b2: [n_out] or [1, n_out].
    """
    n_in, n_hidden = map(int, w1.shape)
    n_out = int(w2.shape[1])
    b1 = jnp.reshape(b1, (1, n_hidden))
    b2 = jnp.reshape(b2, (1, n_out))
    w_isz = jnp.dtype(w1.dtype).itemsize

    n_in_p = _round_up(n_in, 128)
    n_hid_p = _round_up(n_hidden, 128)
    n_out_p = _round_up(n_out, 128)

    cap = _vmem_capacity_bytes()
    if cap >= 100 * _MIB:                    # v5e / v6e: 128 MiB physical VMEM
        budget, vmem_limit, num_tc = 96 * _MIB, 110 * _MIB, 1
    else:                                    # v7x-like: 64 MiB physical, 2 TCs
        budget = 40 * _MIB
        vmem_limit = int(min(52 * _MIB, max(cap - 8 * _MIB, 32 * _MIB)))
        num_tc = 2

    tile_h, tile_n = _choose_feature_tiles(n_in_p, n_hid_p, n_out_p,
                                           w_isz, budget)
    n_hid_e = _round_up(n_hid_p, tile_h)
    n_out_e = _round_up(n_out_p, tile_n)
    nk = n_hid_e // tile_h

    # Pad parameters ONCE (zero padding is exact for linear -> ReLU -> linear).
    w1_p = jnp.pad(w1, ((0, n_in_p - n_in), (0, n_hid_e - n_hidden)))
    b1_p = jnp.pad(b1, ((0, 0), (0, n_hid_e - n_hidden))).reshape(nk, tile_h)
    w2_p = jnp.pad(w2, ((0, n_hid_e - n_hidden), (0, n_out_e - n_out)))
    b2_p = jnp.pad(b2, ((0, 0), (0, n_out_e - n_out)))

    def forward(x):
        orig_shape = x.shape
        x2 = x.reshape(-1, n_in)
        B = x2.shape[0]
        x_isz = jnp.dtype(x2.dtype).itemsize
        b_p8 = _round_up(B, 8)

        # Largest batch tile that fits the budget (fewer weight re-streams).
        tb_cands = sorted({min(c, b_p8)
                           for c in (1024, 512, 256, 128, 64, 32, 16, 8)},
                          reverse=True)
        tile_b = next((c for c in tb_cands
                       if _vmem_bytes(c, tile_h, tile_n, n_in_p, n_hid_e,
                                      x_isz, w_isz) <= budget), 8)

        # 2-TensorCore chips: keep >= 2 parallel units of work when possible.
        if num_tc >= 2 and b_p8 >= 16:
            if _cdiv(b_p8, tile_b) * (n_out_e // tile_n) < 2:
                tile_b = max(8, _round_up(_cdiv(b_p8, 2), 8))

        b_p = _round_up(B, tile_b)
        x_pad = jnp.pad(x2, ((0, b_p - B), (0, n_in_p - n_in)))

        grid = (b_p // tile_b, n_out_e // tile_n, nk)
        nb, nn = grid[0], grid[1]

        needed = _vmem_bytes(tile_b, tile_h, tile_n, n_in_p, n_hid_e,
                             x_isz, w_isz)
        limit = int(min(max(vmem_limit, needed + needed // 4, 16 * _MIB),
                        cap - 2 * _MIB))

        flops = 2 * b_p * n_in_p * n_hid_e + 2 * b_p * n_hid_e * n_out_e
        bytes_accessed = (b_p * n_in_p * x_isz                    # x (once)
                          + nb * nn * n_in_p * n_hid_e * w_isz    # W1 re-stream
                          + nb * n_hid_e * n_out_e * w_isz        # W2 re-stream
                          + n_hid_e * w_isz                       # b1 (resident)
                          + nb * nn * n_out_e * w_isz             # b2
                          + b_p * n_out_e * x_isz)                # out (once)
        cost = pl.CostEstimate(flops=int(flops), transcendentals=0,
                               bytes_accessed=int(bytes_accessed))

        out_p = pl.pallas_call(
            _mlp_kernel,
            out_shape=jax.ShapeDtypeStruct((b_p, n_out_e), x2.dtype),
            grid=grid,
            in_specs=[
                pl.BlockSpec((tile_b, n_in_p), lambda i, j, k: (i, 0)),  # x
                pl.BlockSpec((n_in_p, tile_h), lambda i, j, k: (0, k)),  # W1
                pl.BlockSpec((nk, tile_h),     lambda i, j, k: (0, 0)),  # b1
                pl.BlockSpec((tile_h, tile_n), lambda i, j, k: (k, j)),  # W2
                pl.BlockSpec((1, tile_n),      lambda i, j, k: (0, j)),  # b2
            ],
            out_specs=pl.BlockSpec((tile_b, tile_n), lambda i, j, k: (i, j)),
            scratch_shapes=[pltpu.VMEM((tile_b, tile_n), jnp.float32)],
            compiler_params=pltpu.CompilerParams(
                dimension_semantics=("parallel", "parallel", "arbitrary"),
                vmem_limit_bytes=limit),
            cost_estimate=cost,
        )(x_pad, w1_p, b1_p, w2_p, b2_p)

        out = out_p[:B, :n_out]
        return out.reshape(orig_shape[:-1] + (n_out,))

    return forward


if __name__ == "__main__":
    # Small shapes consistent with the MLP forward.
    B, n_in, n_hidden, n_out = 8, 16, 32, 4

    key = jax.random.PRNGKey(0)
    kx, kw1, kb1, kw2, kb2 = jax.random.split(key, 5)

    x = jax.random.normal(kx, (B, n_in), dtype=jnp.float32)

    # Deterministic parameter init (PyTorch-style uniform bounds, same shapes
    # as nn.Linear; weights stored transposed for the kernel layout).
    bound1 = 1.0 / (n_in ** 0.5)
    w1 = jax.random.uniform(kw1, (n_in, n_hidden), jnp.float32, -bound1, bound1)
    b1 = jax.random.uniform(kb1, (1, n_hidden), jnp.float32, -bound1, bound1)
    bound2 = 1.0 / (n_hidden ** 0.5)
    w2 = jax.random.uniform(kw2, (n_hidden, n_out), jnp.float32, -bound2, bound2)
    b2 = jax.random.uniform(kb2, (1, n_out), jnp.float32, -bound2, bound2)

    mlp = make_mlp(w1, b1, w2, b2)   # pads / lays out parameters once
    out = mlp(x)
    jax.block_until_ready(out)

    # Sanity check against plain-JAX reference (eval-mode dropout == identity).
    ref = jnp.maximum(x @ w1 + b1, 0.0) @ w2 + b2
    assert out.shape == (B, n_out)
    assert jnp.allclose(out, ref, atol=1e-5, rtol=1e-5)

    print("KERNEL_OK")
</pallas_src>

<mosaic_0001>
module attributes {stable_mosaic.version = 11 : i64} {
  func.func @_mlp_kernel(%arg0: i32, %arg1: i32, %arg2: i32, %arg3: memref<8x128xf32, #tpu.memory_space<vmem>>, %arg4: memref<128x128xf32, #tpu.memory_space<vmem>>, %arg5: memref<1x128xf32, #tpu.memory_space<vmem>>, %arg6: memref<128x128xf32, #tpu.memory_space<vmem>>, %arg7: memref<1x128xf32, #tpu.memory_space<vmem>>, %arg8: memref<8x128xf32, #tpu.memory_space<vmem>>, %arg9: memref<8x128xf32, #tpu.memory_space<vmem>>) attributes {dimension_semantics = [#tpu.dimension_semantics<parallel>, #tpu.dimension_semantics<parallel>, #tpu.dimension_semantics<arbitrary>], iteration_bounds = array<i64: 1, 1, 1>, scalar_prefetch = 0 : i64, scratch_operands = 1 : i64, tpu.core_type = #tpu.core_type<tc>, window_params = [{transform_indices = @transform_0, window_bounds = array<i64: 8, 128>}, {transform_indices = @transform_1, window_bounds = array<i64: 128, 128>}, {pipeline_mode = #tpu.pipeline_mode<synchronous>, transform_indices = @transform_2, window_bounds = array<i64: 1, 128>}, {transform_indices = @transform_3, window_bounds = array<i64: 128, 128>}, {transform_indices = @transform_4, window_bounds = array<i64: 1, 128>}, {transform_indices = @transform_5, window_bounds = array<i64: 8, 128>}]} {
    %c0_i32 = arith.constant 0 : i32
    %0 = arith.cmpi eq, %arg2, %c0_i32 : i32
    %1 = arith.extui %0 : i1 to i32
    %c0_i32_0 = arith.constant 0 : i32
    %2 = arith.cmpi ne, %1, %c0_i32_0 : i32
    scf.if %2 {
      %c0_15 = arith.constant 0 : index
      %c0_16 = arith.constant 0 : index
      %20 = vector.load %arg7[%c0_15, %c0_16] : memref<1x128xf32, #tpu.memory_space<vmem>>, vector<1x128xf32>
      %21 = vector.shape_cast %20 : vector<1x128xf32> to vector<1x128xf32>
      %22 = vector.broadcast %21 : vector<1x128xf32> to vector<8x128xf32>
      %c0_17 = arith.constant 0 : index
      %c0_18 = arith.constant 0 : index
      %23 = vector.load %arg9[%c0_17, %c0_18] : memref<8x128xf32, #tpu.memory_space<vmem>>, vector<8x128xf32>
      tpu.vector_store %arg9[%c0_17, %c0_18], %22 {strides = array<i32>} : memref<8x128xf32, #tpu.memory_space<vmem>>, vector<8x128xf32>,
    } else {
    }
    %c0 = arith.constant 0 : index
    %c0_1 = arith.constant 0 : index
    %3 = vector.load %arg3[%c0, %c0_1] : memref<8x128xf32, #tpu.memory_space<vmem>>, vector<8x128xf32>
    %c0_2 = arith.constant 0 : index
    %c0_3 = arith.constant 0 : index
    %4 = vector.load %arg4[%c0_2, %c0_3] : memref<128x128xf32, #tpu.memory_space<vmem>>, vector<128x128xf32>
    %cst = arith.constant dense<0.000000e+00> : vector<8x128xf32>
    %5 = tpu.matmul %3, %4, %cst {dimension_numbers = #tpu.dot_dimension_numbers<[1], [0], [0], [1], [0, 0, 1, 1], [], []>} : vector<8x128xf32>, vector<128x128xf32>, vector<8x128xf32> -> vector<8x128xf32>
    %6 = arith.index_cast %arg2 : i32 to index
    %c0_4 = arith.constant 0 : index
    %7 = vector.load %arg5[%6, %c0_4] : memref<1x128xf32, #tpu.memory_space<vmem>>, vector<1x128xf32>
    %8 = vector.broadcast %7 : vector<1x128xf32> to vector<8x128xf32>
    %9 = arith.addf %5, %8 : vector<8x128xf32>
    %cst_5 = arith.constant 0.000000e+00 : f32
    %10 = vector.broadcast %cst_5 : f32 to vector<8x128xf32>
    %11 = arith.maximumf %9, %10 : vector<8x128xf32>
    %c0_6 = arith.constant 0 : index
    %c0_7 = arith.constant 0 : index
    %12 = vector.load %arg9[%c0_6, %c0_7] : memref<8x128xf32, #tpu.memory_space<vmem>>, vector<8x128xf32>
    %c0_8 = arith.constant 0 : index
    %c0_9 = arith.constant 0 : index
    %13 = vector.load %arg6[%c0_8, %c0_9] : memref<128x128xf32, #tpu.memory_space<vmem>>, vector<128x128xf32>
    %cst_10 = arith.constant dense<0.000000e+00> : vector<8x128xf32>
    %14 = tpu.matmul %11, %13, %cst_10 {dimension_numbers = #tpu.dot_dimension_numbers<[1], [0], [0], [1], [0, 0, 1, 1], [], []>} : vector<8x128xf32>, vector<128x128xf32>, vector<8x128xf32> -> vector<8x128xf32>
    %15 = arith.addf %12, %14 : vector<8x128xf32>
    %c0_11 = arith.constant 0 : index
    %c0_12 = arith.constant 0 : index
    %16 = vector.load %arg9[%c0_11, %c0_12] : memref<8x128xf32, #tpu.memory_space<vmem>>, vector<8x128xf32>
    tpu.vector_store %arg9[%c0_11, %c0_12], %15 {strides = array<i32>} : memref<8x128xf32, #tpu.memory_space<vmem>>, vector<8x128xf32>,
    %c0_i32_13 = arith.constant 0 : i32
    %17 = arith.cmpi eq, %arg2, %c0_i32_13 : i32
    %18 = arith.extui %17 : i1 to i32
    %c0_i32_14 = arith.constant 0 : i32
    %19 = arith.cmpi ne, %18, %c0_i32_14 : i32
    scf.if %19 {
      %c0_15 = arith.constant 0 : index
      %c0_16 = arith.constant 0 : index
      %20 = vector.load %arg9[%c0_15, %c0_16] : memref<8x128xf32, #tpu.memory_space<vmem>>, vector<8x128xf32>
      %c0_17 = arith.constant 0 : index
      %c0_18 = arith.constant 0 : index
      %21 = vector.load %arg8[%c0_17, %c0_18] : memref<8x128xf32, #tpu.memory_space<vmem>>, vector<8x128xf32>
      tpu.vector_store %arg8[%c0_17, %c0_18], %20 {strides = array<i32>} : memref<8x128xf32, #tpu.memory_space<vmem>>, vector<8x128xf32>,
    } else {
    }
    return
  }
  func.func @transform_0(%arg0: i32, %arg1: i32, %arg2: i32) -> (i32, i32) {
    %c0_i32 = arith.constant 0 : i32
    %c0_i32_0 = arith.constant 0 : i32
    return %arg0, %c0_i32 : i32, i32
  }
  func.func @transform_1(%arg0: i32, %arg1: i32, %arg2: i32) -> (i32, i32) {
    %c0_i32 = arith.constant 0 : i32
    %c0_i32_0 = arith.constant 0 : i32
    return %c0_i32, %arg2 : i32, i32
  }
  func.func @transform_2(%arg0: i32, %arg1: i32, %arg2: i32) -> (i32, i32) {
    %c0_i32 = arith.constant 0 : i32
    %c0_i32_0 = arith.constant 0 : i32
    %c0_i32_1 = arith.constant 0 : i32
    return %c0_i32, %c0_i32_0 : i32, i32
  }
  func.func @transform_3(%arg0: i32, %arg1: i32, %arg2: i32) -> (i32, i32) {
    %c0_i32 = arith.constant 0 : i32
    return %arg2, %arg1 : i32, i32
  }
  func.func @transform_4(%arg0: i32, %arg1: i32, %arg2: i32) -> (i32, i32) {
    %c0_i32 = arith.constant 0 : i32
    %c0_i32_0 = arith.constant 0 : i32
    return %c0_i32, %arg1 : i32, i32
  }
  func.func @transform_5(%arg0: i32, %arg1: i32, %arg2: i32) -> (i32, i32) {
    %c0_i32 = arith.constant 0 : i32
    return %arg0, %arg1 : i32, i32
  }
}

</mosaic_0001>

<llo_original>
// kernel: tpu_custom_call.1
$region0: #{tpu_custom_call.1}
  #allocation0 [shape = 'u32[]', space=smem, size = 0x4, offset = 0x4, fixed_abs, tag = 'smem constant byte address 0x4 - core index']
  #allocation1 [shape = 'u32[144,128]{1,0:T(1,128)}', space=vmem, size = 0x12000, scoped, tag = 'internal scratch']
  #allocation2 [shape = 'f32[8,128]{1,0:T(8,128)}', space=vmem, size = 0x1000, scoped, tag = 'scratch operand']
  %s0 = inlined_call_operand.hbm [shape: f32[8,128], index: 0, kind: input, shape index: {}]
  %s1 = inlined_call_operand.hbm [shape: f32[128,128], index: 1, kind: input, shape index: {}]
  %s2 = inlined_call_operand.vmem [shape: f32[1,128], index: 2, kind: input, shape index: {}]
  %s3 = inlined_call_operand.hbm [shape: f32[128,128], index: 3, kind: input, shape index: {}]
  %s4 = inlined_call_operand.vmem [shape: f32[1,128], index: 4, kind: input, shape index: {}]
  %s5 = inlined_call_operand.hbm [shape: f32[8,128], index: 5, kind: output, shape index: {}]
  %s6 = sld [smem:[#allocation0]]
  $region50: #{tpu_custom_call.1} parent=0
    _
  %s8 = ssub.s32 1, %s6
  %s9 = scalar_select 0, %s8, %s6
  $region1: #{tpu_custom_call.1} parent=0
    #allocation3 [shape = 'u8[4096]{0}', space=vmem, size = 0x1000, scoped, tag = 'input window, operand 0, single buffered']
    #allocation4 [shape = 's32[1]{0}', space=sflag, size = 0x4, scoped, tag = 'scoped memory for tpu_custom_call.1']
    #allocation5 [shape = 's32[1]{0}', space=sflag, size = 0x4, scoped, tag = 'scoped memory for tpu_custom_call.1']
    #allocation6 [shape = 'u8[65536]{0}', space=vmem, size = 0x10000, scoped, tag = 'input window, operand 1, single buffered']
    #allocation7 [shape = 's32[1]{0}', space=sflag, size = 0x4, scoped, tag = 'scoped memory for tpu_custom_call.1']
    #allocation8 [shape = 'u8[65536]{0}', space=vmem, size = 0x10000, scoped, tag = 'input window, operand 3, single buffered']
    #allocation9 [shape = 'u8[4096]{0}', space=vmem, size = 0x1000, scoped, tag = 'output window, operand 0, single buffered']
    %10 = vsyncpa [#allocation4], 0
    %11 = vsyncpa [#allocation7], 0
    %12 = vsyncpa [#allocation5], 0
    // Predicated region
    $region2: #{tpu_custom_call.1} parent=1 // pred_check
      _
    $region3: #{tpu_custom_call.1} parent=1 // pred_check_branch
      %14 = sbr.rel (0) target = $region5
    $region4: #{tpu_custom_call.1} parent=1 // pred_region
      %s16 = ssub.s32 128, 128
      %17 = vsyncadd [#allocation4], %s16
      %s19 = sshll.u32 [#allocation3], 4
      %s20 = int_to_ptr.vmem [resolvable:$true] %s19
      %22 = dma.hbm_to_vmem [thread:$0]  %s0, 128, %s20, [#allocation4]
    $region5: #{tpu_custom_call.1} parent=1 // pred_fallthru
      _
    // Predicated region
    $region6: #{tpu_custom_call.1} parent=1 // pred_check
      _
    $region7: #{tpu_custom_call.1} parent=1 // pred_check_branch
      %24 = sbr.rel (0) target = $region9
    $region8: #{tpu_custom_call.1} parent=1 // pred_region
      %s26 = ssub.s32 2048, 2048
      %27 = vsyncadd [#allocation7], %s26
      %s28 = sshll.u32 [#allocation6], 4
      %s29 = int_to_ptr.vmem [resolvable:$true] %s28
      %34 = dma.hbm_to_vmem [thread:$0]  %s1, 2048, %s29, [#allocation7], 128, 128, 8
    $region9: #{tpu_custom_call.1} parent=1 // pred_fallthru
      _
    // Predicated region
    $region10: #{tpu_custom_call.1} parent=1 // pred_check
      _
    $region11: #{tpu_custom_call.1} parent=1 // pred_check_branch
      %36 = sbr.rel (0) target = $region13
    $region12: #{tpu_custom_call.1} parent=1 // pred_region
      _
    $region13: #{tpu_custom_call.1} parent=1 // pred_fallthru
      _
    // Predicated region
    $region14: #{tpu_custom_call.1} parent=1 // pred_check
      _
    $region15: #{tpu_custom_call.1} parent=1 // pred_check_branch
      %38 = sbr.rel (0) target = $region17
    $region16: #{tpu_custom_call.1} parent=1 // pred_region
      %s40 = ssub.s32 2048, 2048
      %41 = vsyncadd [#allocation7], %s40
      %s42 = sshll.u32 [#allocation8], 4
      %s43 = int_to_ptr.vmem [resolvable:$true] %s42
      %48 = dma.hbm_to_vmem [thread:$0]  %s3, 2048, %s43, [#allocation7], 128, 128, 8
    $region17: #{tpu_custom_call.1} parent=1 // pred_fallthru
      _
    // Predicated region
    $region18: #{tpu_custom_call.1} parent=1 // pred_check
      _
    $region19: #{tpu_custom_call.1} parent=1 // pred_check_branch
      %50 = sbr.rel (0) target = $region21
    $region20: #{tpu_custom_call.1} parent=1 // pred_region
      _
    $region21: #{tpu_custom_call.1} parent=1 // pred_fallthru
      _
    // Predicated region
    $region22: #{tpu_custom_call.1} parent=1 // pred_check
      _
    $region23: #{tpu_custom_call.1} parent=1 // pred_check_branch
      %52 = sbr.rel (0) target = $region25
    $region24: #{tpu_custom_call.1} parent=1 // pred_region
      %53 = dma.done [#allocation4], 128
    $region25: #{tpu_custom_call.1} parent=1 // pred_fallthru
      _
    // Predicated region
    $region26: #{tpu_custom_call.1} parent=1 // pred_check
      _
    $region27: #{tpu_custom_call.1} parent=1 // pred_check_branch
      %55 = sbr.rel (0) target = $region29
    $region28: #{tpu_custom_call.1} parent=1 // pred_region
      %56 = dma.done [#allocation7], 2048
    $region29: #{tpu_custom_call.1} parent=1 // pred_fallthru
      _
    // Predicated region
    $region30: #{tpu_custom_call.1} parent=1 // pred_check
      _
    $region31: #{tpu_custom_call.1} parent=1 // pred_check_branch
      %58 = sbr.rel (0) target = $region33
    $region32: #{tpu_custom_call.1} parent=1 // pred_region
      %59 = dma.done [#allocation7], 2048
    $region33: #{tpu_custom_call.1} parent=1 // pred_fallthru
      _
    %p60 = scmp.eq.s32.totalorder 0, 0
    // Predicated region
    $region34: #{tpu_custom_call.1} parent=1 // pred_check
      %p61 = pneg %p60
    $region35: #{tpu_custom_call.1} parent=1 // pred_check_branch
      %63 = sbr.rel (%p61) target = $region37
    $region36: #{tpu_custom_call.1} parent=1 // pred_region
      %v64 = vld [vmem:[%s4] sm:$0x1]
      %v66 = vlaneseq
      %v67 = vshrl.u32 %v66, 7
      %v68 = vsub.s32 0, %v67
      %v69 = vrot.slane %v64, %v68
      %71 = vst [vmem:[#allocation2] sm:$0xff] %v69
    $region37: #{tpu_custom_call.1} parent=1 // pred_fallthru
      _
    %v72 = vld [vmem:[#allocation3] sm:$0xff]
    %v73 = vld [vmem:[#allocation6] sm:$0xff]
    %v74 = vld [vmem:[#allocation6 + $0x8] sm:$0xff]
    %v75 = vld [vmem:[#allocation6 + $0x10] sm:$0xff]
    %v76 = vld [vmem:[#allocation6 + $0x18] sm:$0xff]
    %v77 = vld [vmem:[#allocation6 + $0x20] sm:$0xff]
    %v78 = vld [vmem:[#allocation6 + $0x28] sm:$0xff]
    %v79 = vld [vmem:[#allocation6 + $0x30] sm:$0xff]
    %v80 = vld [vmem:[#allocation6 + $0x38] sm:$0xff]
    %v81 = vld [vmem:[#allocation6 + $0x40] sm:$0xff]
    %v82 = vld [vmem:[#allocation6 + $0x48] sm:$0xff]
    %v83 = vld [vmem:[#allocation6 + $0x50] sm:$0xff]
    %v84 = vld [vmem:[#allocation6 + $0x58] sm:$0xff]
    %v85 = vld [vmem:[#allocation6 + $0x60] sm:$0xff]
    %v86 = vld [vmem:[#allocation6 + $0x68] sm:$0xff]
    %v87 = vld [vmem:[#allocation6 + $0x70] sm:$0xff]
    %v88 = vld [vmem:[#allocation6 + $0x78] sm:$0xff]
    %v89 = vld [vmem:[%s2] sm:$0x1]
    %v91 = vlaneseq
    %v92 = vshrl.u32 %v91, 7
    %v93 = vsub.s32 0, %v92
    %v94 = vrot.slane %v89, %v93
    %96 = vmatprep.subr.mxu0 0.0
    %97 = vmatpush1.msra.mxu0 %v73
    %98 = vmatprep.subr.mxu0 0.0
    %99 = vmatpush1.msra.mxu0 %v74
    %100 = vmatprep.subr.mxu0 0.0
    %101 = vmatpush1.msra.mxu0 %v75
    %102 = vmatprep.subr.mxu0 0.0
    %103 = vmatpush1.msra.mxu0 %v76
    %104 = vmatprep.subr.mxu0 0.0
    %105 = vmatpush1.msra.mxu0 %v77
    %106 = vmatprep.subr.mxu0 0.0
    %107 = vmatpush1.msra.mxu0 %v78
    %108 = vmatprep.subr.mxu0 0.0
    %109 = vmatpush1.msra.mxu0 %v79
    %110 = vmatprep.subr.mxu0 0.0
    %111 = vmatpush1.msra.mxu0 %v80
    %112 = vmatprep.subr.mxu0 0.0
    %113 = vmatpush1.msra.mxu0 %v81
    %114 = vmatprep.subr.mxu0 0.0
    %115 = vmatpush1.msra.mxu0 %v82
    %116 = vmatprep.subr.mxu0 0.0
    %117 = vmatpush1.msra.mxu0 %v83
    %118 = vmatprep.subr.mxu0 0.0
    %119 = vmatpush1.msra.mxu0 %v84
    %120 = vmatprep.subr.mxu0 0.0
    %121 = vmatpush1.msra.mxu0 %v85
    %122 = vmatprep.subr.mxu0 0.0
    %123 = vmatpush1.msra.mxu0 %v86
    %124 = vmatprep.subr.mxu0 0.0
    %125 = vmatpush1.msra.mxu0 %v87
    %126 = vmatprep.subr.mxu0 0.0
    %127 = vmatpush1.msra.mxu0 %v88
    %128 = vmatprep.subr.mxu0 0.0
    %129 = vmatpush1.msra.mxu0 0.0
    %130 = vmatprep.subr.mxu0 0.0
    %131 = vmatpush1.msra.mxu0 0.0
    %132 = vmatprep.subr.mxu0 0.0
    %133 = vmatpush1.msra.mxu0 0.0
    %134 = vmatprep.subr.mxu0 0.0
    %135 = vmatpush1.msra.mxu0 0.0
    %136 = vmatprep.subr.mxu0 0.0
    %137 = vmatpush1.msra.mxu0 0.0
    %138 = vmatprep.subr.mxu0 0.0
    %139 = vmatpush1.msra.mxu0 0.0
    %140 = vmatprep.subr.mxu0 0.0
    %141 = vmatpush1.msra.mxu0 0.0
    %142 = vmatprep.subr.mxu0 0.0
    %143 = vmatpush1.msra.mxu0 0.0
    %144 = vmatprep.subr.mxu0 0.0
    %145 = vmatpush1.msra.mxu0 0.0
    %146 = vmatprep.subr.mxu0 0.0
    %147 = vmatpush1.msra.mxu0 0.0
    %148 = vmatprep.subr.mxu0 0.0
    %149 = vmatpush1.msra.mxu0 0.0
    %150 = vmatprep.subr.mxu0 0.0
    %151 = vmatpush1.msra.mxu0 0.0
    %152 = vmatprep.subr.mxu0 0.0
    %153 = vmatpush1.msra.mxu0 0.0
    %154 = vmatprep.subr.mxu0 0.0
    %155 = vmatpush1.msra.mxu0 0.0
    %156 = vmatprep.subr.mxu0 0.0
    %157 = vmatpush1.msra.mxu0 0.0
    %158 = vmatprep.subr.mxu0 0.0
    %159 = vmatpush1.msra.mxu0 0.0
    %160 = vmatprep.mubr.f32.mxu0 0.0
    %161 = vmatmul.mubr.f32.gmra.mrb[0].mxu0 %v72
    %v162 = vpop.f32.mrb[0].mxu0
    %v163 = vadd.f32 %v94, %v162
    %v164 = vpop.f32.mrb[0].mxu0
    %165 = vdwg.mxu0
    %v166 = vmax.f32 %v163, 0.0
    %v167 = vld [vmem:[#allocation2] sm:$0xff]
    %v168 = vld [vmem:[#allocation8] sm:$0xff]
    %v169 = vld [vmem:[#allocation8 + $0x8] sm:$0xff]
    %v170 = vld [vmem:[#allocation8 + $0x10] sm:$0xff]
    %v171 = vld [vmem:[#allocation8 + $0x18] sm:$0xff]
    %v172 = vld [vmem:[#allocation8 + $0x20] sm:$0xff]
    %v173 = vld [vmem:[#allocation8 + $0x28] sm:$0xff]
    %v174 = vld [vmem:[#allocation8 + $0x30] sm:$0xff]
    %v175 = vld [vmem:[#allocation8 + $0x38] sm:$0xff]
    %v176 = vld [vmem:[#allocation8 + $0x40] sm:$0xff]
    %v177 = vld [vmem:[#allocation8 + $0x48] sm:$0xff]
    %v178 = vld [vmem:[#allocation8 + $0x50] sm:$0xff]
    %v179 = vld [vmem:[#allocation8 + $0x58] sm:$0xff]
    %v180 = vld [vmem:[#allocation8 + $0x60] sm:$0xff]
    %v181 = vld [vmem:[#allocation8 + $0x68] sm:$0xff]
    %v182 = vld [vmem:[#allocation8 + $0x70] sm:$0xff]
    %v183 = vld [vmem:[#allocation8 + $0x78] sm:$0xff]
    %184 = vmatprep.subr.mxu0 0.0
    %185 = vmatpush1.msra.mxu0 %v168
    %186 = vmatprep.subr.mxu0 0.0
    %187 = vmatpush1.msra.mxu0 %v169
    %188 = vmatprep.subr.mxu0 0.0
    %189 = vmatpush1.msra.mxu0 %v170
    %190 = vmatprep.subr.mxu0 0.0
    %191 = vmatpush1.msra.mxu0 %v171
    %192 = vmatprep.subr.mxu0 0.0
    %193 = vmatpush1.msra.mxu0 %v172
    %194 = vmatprep.subr.mxu0 0.0
    %195 = vmatpush1.msra.mxu0 %v173
    %196 = vmatprep.subr.mxu0 0.0
    %197 = vmatpush1.msra.mxu0 %v174
    %198 = vmatprep.subr.mxu0 0.0
    %199 = vmatpush1.msra.mxu0 %v175
    %200 = vmatprep.subr.mxu0 0.0
    %201 = vmatpush1.msra.mxu0 %v176
    %202 = vmatprep.subr.mxu0 0.0
    %203 = vmatpush1.msra.mxu0 %v177
    %204 = vmatprep.subr.mxu0 0.0
    %205 = vmatpush1.msra.mxu0 %v178
    %206 = vmatprep.subr.mxu0 0.0
    %207 = vmatpush1.msra.mxu0 %v179
    %208 = vmatprep.subr.mxu0 0.0
    %209 = vmatpush1.msra.mxu0 %v180
    %210 = vmatprep.subr.mxu0 0.0
    %211 = vmatpush1.msra.mxu0 %v181
    %212 = vmatprep.subr.mxu0 0.0
    %213 = vmatpush1.msra.mxu0 %v182
    %214 = vmatprep.subr.mxu0 0.0
    %215 = vmatpush1.msra.mxu0 %v183
    %216 = vmatprep.subr.mxu0 0.0
    %217 = vmatpush1.msra.mxu0 0.0
    %218 = vmatprep.subr.mxu0 0.0
    %219 = vmatpush1.msra.mxu0 0.0
    %220 = vmatprep.subr.mxu0 0.0
    %221 = vmatpush1.msra.mxu0 0.0
    %222 = vmatprep.subr.mxu0 0.0
    %223 = vmatpush1.msra.mxu0 0.0
    %224 = vmatprep.subr.mxu0 0.0
    %225 = vmatpush1.msra.mxu0 0.0
    %226 = vmatprep.subr.mxu0 0.0
    %227 = vmatpush1.msra.mxu0 0.0
    %228 = vmatprep.subr.mxu0 0.0
    %229 = vmatpush1.msra.mxu0 0.0
    %230 = vmatprep.subr.mxu0 0.0
    %231 = vmatpush1.msra.mxu0 0.0
    %232 = vmatprep.subr.mxu0 0.0
    %233 = vmatpush1.msra.mxu0 0.0
    %234 = vmatprep.subr.mxu0 0.0
    %235 = vmatpush1.msra.mxu0 0.0
    %236 = vmatprep.subr.mxu0 0.0
    %237 = vmatpush1.msra.mxu0 0.0
    %238 = vmatprep.subr.mxu0 0.0
    %239 = vmatpush1.msra.mxu0 0.0
    %240 = vmatprep.subr.mxu0 0.0
    %241 = vmatpush1.msra.mxu0 0.0
    %242 = vmatprep.subr.mxu0 0.0
    %243 = vmatpush1.msra.mxu0 0.0
    %244 = vmatprep.subr.mxu0 0.0
    %245 = vmatpush1.msra.mxu0 0.0
    %246 = vmatprep.subr.mxu0 0.0
    %247 = vmatpush1.msra.mxu0 0.0
    %248 = vmatprep.mubr.f32.mxu0 0.0
    %249 = vmatmul.mubr.f32.gmra.mrb[0].mxu0 %v166
    %v250 = vpop.f32.mrb[0].mxu0
    %v251 = vadd.f32 0.0, %v250
    %v252 = vpop.f32.mrb[0].mxu0
    %253 = vdwg.mxu0
    %v254 = vadd.f32 %v167, %v251
    %255 = vst [vmem:[#allocation2] sm:$0xff] %v254
    // Predicated region
    $region38: #{tpu_custom_call.1} parent=1 // pred_check
      %p256 = pneg %p60
    $region39: #{tpu_custom_call.1} parent=1 // pred_check_branch
      %258 = sbr.rel (%p256) target = $region41
    $region40: #{tpu_custom_call.1} parent=1 // pred_region
      %v259 = vld [vmem:[#allocation2] sm:$0xff]
      %260 = vst [vmem:[#allocation9] sm:$0xff] %v259
    $region41: #{tpu_custom_call.1} parent=1 // pred_fallthru
      _
    // Predicated region
    $region42: #{tpu_custom_call.1} parent=1 // pred_check
      _
    $region43: #{tpu_custom_call.1} parent=1 // pred_check_branch
      %262 = sbr.rel (0) target = $region45
    $region44: #{tpu_custom_call.1} parent=1 // pred_region
      %s264 = ssub.s32 128, 128
      %265 = vsyncadd [#allocation5], %s264
      %s267 = sshll.u32 [#allocation9], 4
      %s268 = int_to_ptr.vmem [resolvable:$true] %s267
      %270 = dma.vmem_to_hbm [thread:$0]  %s268, 128, %s5, [#allocation5]
    $region45: #{tpu_custom_call.1} parent=1 // pred_fallthru
      _
    // Predicated region
    $region46: #{tpu_custom_call.1} parent=1 // pred_check
      _
    $region47: #{tpu_custom_call.1} parent=1 // pred_check_branch
      %272 = sbr.rel (0) target = $region49
    $region48: #{tpu_custom_call.1} parent=1 // pred_region
      %273 = dma.done [#allocation5], 128
    $region49: #{tpu_custom_call.1} parent=1 // pred_fallthru
      _
    %274 = vsyncpa [#allocation4], 1
    %275 = vsyncpa [#allocation7], 1
    %276 = vsyncpa [#allocation5], 1

</llo_original>
